<compile_context>
chip_gen: v5e
topology: v5e:2x2
jax: 0.10.0
libtpu: 0.0.40
codegen_flags: <defaults>
</compile_context>

<pallas_src>
import jax
import jax.numpy as jnp
from jax.experimental import pallas as pl
from jax.experimental.pallas import tpu as pltpu


def classifier_kernel(xT_ref, w1_ref, b1_ref, w2_ref, b2_ref, w3_ref, b3_ref, o_ref):
    # fc1 + tanh   (dropout d1 is identity in eval mode)
    h1 = jnp.tanh(
        jnp.dot(w1_ref[...], xT_ref[...], preferred_element_type=jnp.float32)
        + b1_ref[...]                                   # (hid,1) broadcast along lanes
    )                                                   # (hid, bt) f32
    # fc2 + tanh   (dropout d2 is identity in eval mode)
    h2 = jnp.tanh(
        jnp.dot(w2_ref[...], h1.astype(jnp.bfloat16),
                preferred_element_type=jnp.float32)
        + b2_ref[...]
    )                                                   # (hid, bt) f32
    # fc3 (output width 1): VPU multiply + sublane reduce (XLU slot, not MXU);
    # b3 is a scalar read from SMEM.
    out = jnp.sum(h2 * w3_ref[...], axis=0, keepdims=True) + b3_ref[0]     # (1, bt)
    o_ref[...] = out.astype(o_ref.dtype)


def _pick_batch_tile(B):
    """Lane-axis (batch) tile: full batch if small, else a multiple of 128
    capped at 1024 and chosen so the grid has >= 2 steps (pipelining, and both
    TensorCores on v7x via the 'parallel' grid axis)."""
    if B <= 128:
        return int(B)
    n_steps = max(2, int(pl.cdiv(B, 1024)))
    tile = 128 * int(pl.cdiv(pl.cdiv(B, n_steps), 128))
    return int(min(1024, tile))


def classifier_forward(x, params, *, batch_tile=None):
    """x: (B, num_inputs) f32. params: PyTorch-layout weights (see init_params)."""
    B, num_inputs = x.shape
    hidden = params["w1"].shape[0]

    if batch_tile is None:
        batch_tile = _pick_batch_tile(B)

    num_tiles = int(pl.cdiv(B, batch_tile))
    Bp = num_tiles * batch_tile

    # Transpose + bf16 cast in the wrapper: layout plumbing so the kernel sees a
    # lane-dense, half-width input tile.  Padded tail columns are discarded.
    xT = x.T.astype(jnp.bfloat16)                       # (num_inputs, B)
    if Bp != B:
        xT = jnp.pad(xT, ((0, 0), (0, Bp - B)))

    # bf16 matmul operands (resident in VMEM across the whole grid);
    # bias / head vectors stay f32 for the VPU/EUP path.
    w1 = params["w1"].astype(jnp.bfloat16)
    w2 = params["w2"].astype(jnp.bfloat16)
    b1 = params["b1"].astype(jnp.float32)
    b2 = params["b2"].astype(jnp.float32)
    w3 = params["w3"].astype(jnp.float32)
    b3 = params["b3"].astype(jnp.float32)               # (1,) scalar -> SMEM

    # VMEM budget guard (double-buffered x/out tiles + resident weights), with
    # headroom; clamped well under the v7x 64 MiB per-core ceiling.
    est = (
        2 * num_inputs * batch_tile * 2                 # x^T tile, double buffered, bf16
        + 2 * 8 * batch_tile * 4                        # out tile (padded to 8 sublanes), f32
        + (hidden * num_inputs + hidden * hidden) * 2   # bf16 weights (resident)
        + 3 * hidden * 128 * 4                          # b1/b2/w3 padded (hid,128) tiles
    )
    vmem_limit = int(min(max(4 * est, 8 * 1024 * 1024), 48 * 1024 * 1024))

    in_specs = [
        pl.BlockSpec((num_inputs, batch_tile), lambda i: (0, i)),   # x^T tile
        pl.BlockSpec((hidden, num_inputs), lambda i: (0, 0)),       # w1 (resident)
        pl.BlockSpec((hidden, 1), lambda i: (0, 0)),                # b1 column
        pl.BlockSpec((hidden, hidden), lambda i: (0, 0)),           # w2 (resident)
        pl.BlockSpec((hidden, 1), lambda i: (0, 0)),                # b2 column
        pl.BlockSpec((hidden, 1), lambda i: (0, 0)),                # w3 column (fc3 weight^T)
        pl.BlockSpec(memory_space=pltpu.MemorySpace.SMEM),          # b3 scalar
    ]
    out_specs = pl.BlockSpec((1, batch_tile), lambda i: (0, i))     # lane-dense output

    out = pl.pallas_call(
        classifier_kernel,
        out_shape=jax.ShapeDtypeStruct((1, Bp), jnp.float32),
        grid=(num_tiles,),
        in_specs=in_specs,
        out_specs=out_specs,
        compiler_params=pltpu.CompilerParams(
            dimension_semantics=("parallel",),
            vmem_limit_bytes=vmem_limit,
        ),
    )(xT, w1, b1, w2, b2, w3, b3)

    return out[:, :B].T                                 # (B, 1)


def init_params(key, num_inputs, hidden_dim):
    """Mirrors nn.Linear default init (uniform +/- 1/sqrt(fan_in)), then
    fc3.weight *= 0.1 and fc3.bias *= 0.0 as in the PyTorch __init__.
    Weights keep PyTorch (out, in) layout; biases are stored as (out, 1)
    columns so they broadcast along the lane (batch) axis."""
    k1, k2, k3, k4, k5, k6 = jax.random.split(key, 6)

    def lin_init(kw, kb, fan_in, w_shape, b_shape):
        bound = 1.0 / float(fan_in) ** 0.5
        w = jax.random.uniform(kw, w_shape, jnp.float32, -bound, bound)
        b = jax.random.uniform(kb, b_shape, jnp.float32, -bound, bound)
        return w, b

    w1, b1 = lin_init(k1, k2, num_inputs, (hidden_dim, num_inputs), (hidden_dim, 1))
    w2, b2 = lin_init(k3, k4, hidden_dim, (hidden_dim, hidden_dim), (hidden_dim, 1))
    # fc3.weight is (1, hidden) in PyTorch; stored here as a (hidden, 1) column.
    w3, b3 = lin_init(k5, k6, hidden_dim, (hidden_dim, 1), (1,))
    w3 = w3 * 0.1
    b3 = b3 * 0.0
    return dict(w1=w1, b1=b1, w2=w2, b2=b2, w3=w3, b3=b3)


def reference_forward(x, p):
    """Pure-JAX reference mirroring the kernel numerics (bf16 matmul operands,
    f32 accumulation, f32 tanh/bias, VPU-style fc3 head)."""
    xT = x.T.astype(jnp.bfloat16)
    w1 = p["w1"].astype(jnp.bfloat16)
    w2 = p["w2"].astype(jnp.bfloat16)
    h1 = jnp.tanh(jnp.dot(w1, xT, preferred_element_type=jnp.float32) + p["b1"])
    h2 = jnp.tanh(jnp.dot(w2, h1.astype(jnp.bfloat16),
                          preferred_element_type=jnp.float32) + p["b2"])
    out = jnp.sum(h2 * p["w3"], axis=0, keepdims=True) + p["b3"][0]
    return out.T


if __name__ == "__main__":
    num_inputs = 32
    hidden_dim = 32

    key = jax.random.PRNGKey(0)
    kx, kp, kx2 = jax.random.split(key, 3)
    params = init_params(kp, num_inputs, hidden_dim)

    # Small case: single tile (full-batch lane block).
    x_small = jax.random.normal(kx, (8, num_inputs), jnp.float32)
    out_small = jax.block_until_ready(classifier_forward(x_small, params))
    ref_small = reference_forward(x_small, params)
    assert out_small.shape == (8, 1), out_small.shape
    assert jnp.allclose(out_small, ref_small, atol=1e-3, rtol=1e-3), "small-case mismatch"

    # Multi-tile case: exercises lane-dense batch tiling, tail padding and the
    # 2-step 'parallel' grid (both TensorCores on v7x).
    x_big = jax.random.normal(kx2, (300, num_inputs), jnp.float32)
    out_big = jax.block_until_ready(classifier_forward(x_big, params))
    ref_big = reference_forward(x_big, params)
    assert out_big.shape == (300, 1), out_big.shape
    assert jnp.allclose(out_big, ref_big, atol=1e-3, rtol=1e-3), "multi-tile mismatch"

    print("KERNEL_OK")
</pallas_src>

<mosaic_0001>
module attributes {stable_mosaic.version = 11 : i64} {
  func.func @classifier_kernel(%arg0: i32, %arg1: memref<32x8xbf16, #tpu.memory_space<vmem>>, %arg2: memref<32x32xbf16, #tpu.memory_space<vmem>>, %arg3: memref<32x1xf32, #tpu.memory_space<vmem>>, %arg4: memref<32x32xbf16, #tpu.memory_space<vmem>>, %arg5: memref<32x1xf32, #tpu.memory_space<vmem>>, %arg6: memref<32x1xf32, #tpu.memory_space<vmem>>, %arg7: memref<1xf32, #tpu.memory_space<smem>>, %arg8: memref<1x8xf32, #tpu.memory_space<vmem>>) attributes {dimension_semantics = [#tpu.dimension_semantics<parallel>], iteration_bounds = array<i64: 1>, scalar_prefetch = 0 : i64, scratch_operands = 0 : i64, tpu.core_type = #tpu.core_type<tc>, window_params = [{transform_indices = @transform_0, window_bounds = array<i64: 32, 8>}, {pipeline_mode = #tpu.pipeline_mode<synchronous>, transform_indices = @transform_1, window_bounds = array<i64: 32, 32>}, {pipeline_mode = #tpu.pipeline_mode<synchronous>, transform_indices = @transform_2, window_bounds = array<i64: 32, 1>}, {pipeline_mode = #tpu.pipeline_mode<synchronous>, transform_indices = @transform_3, window_bounds = array<i64: 32, 32>}, {pipeline_mode = #tpu.pipeline_mode<synchronous>, transform_indices = @transform_4, window_bounds = array<i64: 32, 1>}, {pipeline_mode = #tpu.pipeline_mode<synchronous>, transform_indices = @transform_5, window_bounds = array<i64: 32, 1>}, {transform_indices = @transform_6, window_bounds = array<i64: 1>}, {transform_indices = @transform_7, window_bounds = array<i64: 1, 8>}]} {
    %c0 = arith.constant 0 : index
    %c0_0 = arith.constant 0 : index
    %0 = vector.load %arg2[%c0, %c0_0] : memref<32x32xbf16, #tpu.memory_space<vmem>>, vector<32x32xbf16>
    %c0_1 = arith.constant 0 : index
    %c0_2 = arith.constant 0 : index
    %1 = vector.load %arg1[%c0_1, %c0_2] : memref<32x8xbf16, #tpu.memory_space<vmem>>, vector<32x8xbf16>
    %cst = arith.constant dense<0.000000e+00> : vector<32x8xf32>
    %2 = tpu.matmul %0, %1, %cst {dimension_numbers = #tpu.dot_dimension_numbers<[1], [0], [0], [1], [0, 0, 1, 1], [], []>} : vector<32x32xbf16>, vector<32x8xbf16>, vector<32x8xf32> -> vector<32x8xf32>
    %c0_3 = arith.constant 0 : index
    %c0_4 = arith.constant 0 : index
    %3 = vector.load %arg3[%c0_3, %c0_4] : memref<32x1xf32, #tpu.memory_space<vmem>>, vector<32x1xf32>
    %4 = vector.broadcast %3 : vector<32x1xf32> to vector<32x8xf32>
    %5 = arith.addf %2, %4 : vector<32x8xf32>
    %6 = math.tanh %5 : vector<32x8xf32>
    %c0_5 = arith.constant 0 : index
    %c0_6 = arith.constant 0 : index
    %7 = vector.load %arg4[%c0_5, %c0_6] : memref<32x32xbf16, #tpu.memory_space<vmem>>, vector<32x32xbf16>
    %8 = arith.truncf %6 : vector<32x8xf32> to vector<32x8xbf16>
    %cst_7 = arith.constant dense<0.000000e+00> : vector<32x8xf32>
    %9 = tpu.matmul %7, %8, %cst_7 {dimension_numbers = #tpu.dot_dimension_numbers<[1], [0], [0], [1], [0, 0, 1, 1], [], []>} : vector<32x32xbf16>, vector<32x8xbf16>, vector<32x8xf32> -> vector<32x8xf32>
    %c0_8 = arith.constant 0 : index
    %c0_9 = arith.constant 0 : index
    %10 = vector.load %arg5[%c0_8, %c0_9] : memref<32x1xf32, #tpu.memory_space<vmem>>, vector<32x1xf32>
    %11 = vector.broadcast %10 : vector<32x1xf32> to vector<32x8xf32>
    %12 = arith.addf %9, %11 : vector<32x8xf32>
    %13 = math.tanh %12 : vector<32x8xf32>
    %c0_10 = arith.constant 0 : index
    %c0_11 = arith.constant 0 : index
    %14 = vector.load %arg6[%c0_10, %c0_11] : memref<32x1xf32, #tpu.memory_space<vmem>>, vector<32x1xf32>
    %15 = vector.broadcast %14 : vector<32x1xf32> to vector<32x8xf32>
    %16 = arith.mulf %13, %15 : vector<32x8xf32>
    %cst_12 = arith.constant dense<0.000000e+00> : vector<8xf32>
    %17 = vector.multi_reduction <add>, %16, %cst_12 [0] : vector<32x8xf32> to vector<8xf32>
    %18 = vector.shape_cast %17 : vector<8xf32> to vector<1x8xf32>
    %c0_13 = arith.constant 0 : index
    %19 = memref.load %arg7[%c0_13] : memref<1xf32, #tpu.memory_space<smem>>
    %20 = vector.broadcast %19 : f32 to vector<1x8xf32>
    %21 = arith.addf %18, %20 : vector<1x8xf32>
    %c0_14 = arith.constant 0 : index
    %c0_15 = arith.constant 0 : index
    %22 = vector.load %arg8[%c0_14, %c0_15] : memref<1x8xf32, #tpu.memory_space<vmem>>, vector<1x8xf32>
    tpu.vector_store %arg8[%c0_14, %c0_15], %21 {strides = array<i32>} : memref<1x8xf32, #tpu.memory_space<vmem>>, vector<1x8xf32>,
    return
  }
  func.func @transform_0(%arg0: i32) -> (i32, i32) {
    %c0_i32 = arith.constant 0 : i32
    %c0_i32_0 = arith.constant 0 : i32
    return %c0_i32, %arg0 : i32, i32
  }
  func.func @transform_1(%arg0: i32) -> (i32, i32) {
    %c0_i32 = arith.constant 0 : i32
    %c0_i32_0 = arith.constant 0 : i32
    %c0_i32_1 = arith.constant 0 : i32
    return %c0_i32, %c0_i32_0 : i32, i32
  }
  func.func @transform_2(%arg0: i32) -> (i32, i32) {
    %c0_i32 = arith.constant 0 : i32
    %c0_i32_0 = arith.constant 0 : i32
    %c0_i32_1 = arith.constant 0 : i32
    return %c0_i32, %c0_i32_0 : i32, i32
  }
  func.func @transform_3(%arg0: i32) -> (i32, i32) {
    %c0_i32 = arith.constant 0 : i32
    %c0_i32_0 = arith.constant 0 : i32
    %c0_i32_1 = arith.constant 0 : i32
    return %c0_i32, %c0_i32_0 : i32, i32
  }
  func.func @transform_4(%arg0: i32) -> (i32, i32) {
    %c0_i32 = arith.constant 0 : i32
    %c0_i32_0 = arith.constant 0 : i32
    %c0_i32_1 = arith.constant 0 : i32
    return %c0_i32, %c0_i32_0 : i32, i32
  }
  func.func @transform_5(%arg0: i32) -> (i32, i32) {
    %c0_i32 = arith.constant 0 : i32
    %c0_i32_0 = arith.constant 0 : i32
    %c0_i32_1 = arith.constant 0 : i32
    return %c0_i32, %c0_i32_0 : i32, i32
  }
  func.func @transform_6(%arg0: i32) -> i32 {
    %c0_i32 = arith.constant 0 : i32
    %c0_i32_0 = arith.constant 0 : i32
    return %c0_i32 : i32
  }
  func.func @transform_7(%arg0: i32) -> (i32, i32) {
    %c0_i32 = arith.constant 0 : i32
    %c0_i32_0 = arith.constant 0 : i32
    return %c0_i32, %arg0 : i32, i32
  }
}

</mosaic_0001>

<llo_original>
// kernel: tpu_custom_call.1
$region0: #{tpu_custom_call.1}
  #allocation0 [shape = 'u32[]', space=smem, size = 0x4, offset = 0x4, fixed_abs, tag = 'smem constant byte address 0x4 - core index']
  #allocation1 [shape = 'u32[72,128]{1,0:T(1,128)}', space=vmem, size = 0x9000, scoped, tag = 'internal scratch']
  #allocation2 [shape = 'f32[1]{0:T(128)S(6)}', space=smem, size = 0x200, scoped, tag = 'scoped memory for tpu_custom_call.1']
  %s0 = inlined_call_operand.vmem [shape: bf16[32,8], index: 0, kind: input, shape index: {}]
  %s1 = inlined_call_operand.vmem [shape: bf16[32,32], index: 1, kind: input, shape index: {}]
  %s2 = inlined_call_operand.vmem [shape: f32[32,1], index: 2, kind: input, shape index: {}]
  %s3 = inlined_call_operand.vmem [shape: bf16[32,32], index: 3, kind: input, shape index: {}]
  %s4 = inlined_call_operand.vmem [shape: f32[32,1], index: 4, kind: input, shape index: {}]
  %s5 = inlined_call_operand.vmem [shape: f32[32,1], index: 5, kind: input, shape index: {}]
  %s6 = inlined_call_operand.<no memory space> [shape: f32[1], index: 6, kind: input, shape index: {}]
  %s7 = inlined_call_operand.hbm [shape: f32[1,8], index: 7, kind: output, shape index: {}]
  %s8 = sld [smem:[#allocation0]]
  $region38: #{tpu_custom_call.1} parent=0
    _
  %s10 = ssub.s32 1, %s8
  %s11 = scalar_select 0, %s10, %s8
  %12 = sst [smem:[#allocation2]] %s6
  $region1: #{tpu_custom_call.1} parent=0
    #allocation3 [shape = 'u8[512]{0}', space=vmem, size = 0x400, scoped, tag = 'output window, operand 0, single buffered']
    #allocation4 [shape = 's32[1]{0}', space=sflag, size = 0x4, scoped, tag = 'scoped memory for tpu_custom_call.1']
    %13 = vsyncpa [#allocation4], 0
    // Predicated region
    $region2: #{tpu_custom_call.1} parent=1 // pred_check
      _
    $region3: #{tpu_custom_call.1} parent=1 // pred_check_branch
      %15 = sbr.rel (0) target = $region5
    $region4: #{tpu_custom_call.1} parent=1 // pred_region
      _
    $region5: #{tpu_custom_call.1} parent=1 // pred_fallthru
      _
    // Predicated region
    $region6: #{tpu_custom_call.1} parent=1 // pred_check
      _
    $region7: #{tpu_custom_call.1} parent=1 // pred_check_branch
      %17 = sbr.rel (0) target = $region9
    $region8: #{tpu_custom_call.1} parent=1 // pred_region
      _
    $region9: #{tpu_custom_call.1} parent=1 // pred_fallthru
      _
    // Predicated region
    $region10: #{tpu_custom_call.1} parent=1 // pred_check
      _
    $region11: #{tpu_custom_call.1} parent=1 // pred_check_branch
      %19 = sbr.rel (0) target = $region13
    $region12: #{tpu_custom_call.1} parent=1 // pred_region
      _
    $region13: #{tpu_custom_call.1} parent=1 // pred_fallthru
      _
    // Predicated region
    $region14: #{tpu_custom_call.1} parent=1 // pred_check
      _
    $region15: #{tpu_custom_call.1} parent=1 // pred_check_branch
      %21 = sbr.rel (0) target = $region17
    $region16: #{tpu_custom_call.1} parent=1 // pred_region
      _
    $region17: #{tpu_custom_call.1} parent=1 // pred_fallthru
      _
    // Predicated region
    $region18: #{tpu_custom_call.1} parent=1 // pred_check
      _
    $region19: #{tpu_custom_call.1} parent=1 // pred_check_branch
      %23 = sbr.rel (0) target = $region21
    $region20: #{tpu_custom_call.1} parent=1 // pred_region
      _
    $region21: #{tpu_custom_call.1} parent=1 // pred_fallthru
      _
    // Predicated region
    $region22: #{tpu_custom_call.1} parent=1 // pred_check
      _
    $region23: #{tpu_custom_call.1} parent=1 // pred_check_branch
      %25 = sbr.rel (0) target = $region25
    $region24: #{tpu_custom_call.1} parent=1 // pred_region
      _
    $region25: #{tpu_custom_call.1} parent=1 // pred_fallthru
      _
    // Predicated region
    $region26: #{tpu_custom_call.1} parent=1 // pred_check
      _
    $region27: #{tpu_custom_call.1} parent=1 // pred_check_branch
      %27 = sbr.rel (0) target = $region29
    $region28: #{tpu_custom_call.1} parent=1 // pred_region
      _
    $region29: #{tpu_custom_call.1} parent=1 // pred_fallthru
      _
    %v29 = vld [vmem:[%s1] sm:$0xf]
    %v30 = vld [vmem:[%s1 + $0x4] sm:$0xf]
    %v31 = vld [vmem:[%s1 + $0x8] sm:$0xf]
    %v32 = vld [vmem:[%s1 + $0xc] sm:$0xf]
    %v33 = vld [vmem:[%s0] sm:$0xf]
    %v34 = vld [vmem:[%s0 + $0x4] sm:$0xf]
    %v35 = vld [vmem:[%s0 + $0x8] sm:$0xf]
    %v36 = vld [vmem:[%s0 + $0xc] sm:$0xf]
    %v37 = vld [vmem:[%s2] sm:$0xff]
    %v38 = vld [vmem:[%s2 + $0x8] sm:$0xff]
    %v39 = vld [vmem:[%s2 + $0x10] sm:$0xff]
    %v40 = vld [vmem:[%s2 + $0x18] sm:$0xff]
    %42 = vset.pattern.permute.xlu0 0
    %43 = vperm.xlu0 %42, %v37
    %v44 = vpop.permute.xlu0 %43
    %47 = vset.pattern.permute.xlu0 0
    %48 = vperm.xlu0 %47, %v38
    %v49 = vpop.permute.xlu0 %48
    %52 = vset.pattern.permute.xlu0 0
    %53 = vperm.xlu0 %52, %v39
    %v54 = vpop.permute.xlu0 %53
    %57 = vset.pattern.permute.xlu0 0
    %58 = vperm.xlu0 %57, %v40
    %v59 = vpop.permute.xlu0 %58
    %v65 = vunpack.c.l.b16 %v29
    %v66 = vunpack.c.l.b16 %v30
    %v67 = vunpack.c.l.b16 %v31
    %v68 = vunpack.c.l.b16 %v32
    %v69 = vpack.c.b16 %v66, %v65
    %v70 = vpack.c.b16 %v68, %v67
    %v75 = vunpack.c.l.b16 %v33
    %v76 = vunpack.c.l.b16 %v34
    %v77 = vunpack.c.l.b16 %v35
    %v78 = vunpack.c.l.b16 %v36
    %v79 = vpack.c.b16 %v76, %v75
    %v80 = vpack.c.b16 %v78, %v77
    %vm83 = vcmask 261120
    %v85 = vsel %vm83, %v69, 0
    %v88 = vsel %vm83, %v70, 0
    %90 = vmatpush.bf16.msra.mxu0 0
    %91 = vmatpush.bf16.msra.mxu0 0
    %92 = vmatpush.bf16.msra.mxu0 0
    %93 = vmatpush.bf16.msra.mxu0 0
    %94 = vmatpush.bf16.msra.mxu0 0
    %95 = vmatpush.bf16.msra.mxu0 0
    %96 = vmatpush.bf16.msra.mxu0 %v80
    %97 = vmatpush.bf16.msra.mxu0 %v79
    %98 = vmatmul.bf16.gmra.mxu0 %v85
    %v99 = vpop.f32.mrf.mxu0
    %v100 = vadd.f32 %v44, %v99
    %v101 = vpop.f32.mrf.mxu0
    %v102 = vadd.f32 %v49, %v101
    %103 = vmatmul.bf16.gmra.mxu0 %v88
    %v104 = vpop.f32.mrf.mxu0
    %v105 = vadd.f32 %v54, %v104
    %v106 = vpop.f32.mrf.mxu0
    %v107 = vadd.f32 %v59, %v106
    %108 = vdwg.mxu0
    %v109 = vtanh.pop %v100
    %v110 = vtanh.pop %v102
    %v111 = vtanh.pop %v105
    %v112 = vtanh.pop %v107
    %v113 = vld [vmem:[%s3] sm:$0xf]
    %v114 = vld [vmem:[%s3 + $0x4] sm:$0xf]
    %v115 = vld [vmem:[%s3 + $0x8] sm:$0xf]
    %v116 = vld [vmem:[%s3 + $0xc] sm:$0xf]
    %v117 = vpack.c.bf16 %v110, %v109
    %v118 = vpack.c.bf16 %v112, %v111
    %v119 = vld [vmem:[%s4] sm:$0xff]
    %v120 = vld [vmem:[%s4 + $0x8] sm:$0xff]
    %v121 = vld [vmem:[%s4 + $0x10] sm:$0xff]
    %v122 = vld [vmem:[%s4 + $0x18] sm:$0xff]
    %124 = vset.pattern.permute.xlu0 0
    %125 = vperm.xlu0 %124, %v119
    %v126 = vpop.permute.xlu0 %125
    %129 = vset.pattern.permute.xlu0 0
    %130 = vperm.xlu0 %129, %v120
    %v131 = vpop.permute.xlu0 %130
    %134 = vset.pattern.permute.xlu0 0
    %135 = vperm.xlu0 %134, %v121
    %v136 = vpop.permute.xlu0 %135
    %139 = vset.pattern.permute.xlu0 0
    %140 = vperm.xlu0 %139, %v122
    %v141 = vpop.permute.xlu0 %140
    %v147 = vunpack.c.l.b16 %v113
    %v148 = vunpack.c.l.b16 %v114
    %v149 = vunpack.c.l.b16 %v115
    %v150 = vunpack.c.l.b16 %v116
    %v151 = vpack.c.b16 %v148, %v147
    %v152 = vpack.c.b16 %v150, %v149
    %v154 = vsel %vm83, %v151, 0
    %v157 = vsel %vm83, %v152, 0
    %159 = vmatpush.bf16.msra.mxu0 0
    %160 = vmatpush.bf16.msra.mxu0 0
    %161 = vmatpush.bf16.msra.mxu0 0
    %162 = vmatpush.bf16.msra.mxu0 0
    %163 = vmatpush.bf16.msra.mxu0 0
    %164 = vmatpush.bf16.msra.mxu0 0
    %165 = vmatpush.bf16.msra.mxu0 %v118
    %166 = vmatpush.bf16.msra.mxu0 %v117
    %167 = vmatmul.bf16.gmra.mxu0 %v154
    %v168 = vpop.f32.mrf.mxu0
    %v169 = vadd.f32 %v126, %v168
    %v170 = vpop.f32.mrf.mxu0
    %v171 = vadd.f32 %v131, %v170
    %172 = vmatmul.bf16.gmra.mxu0 %v157
    %v173 = vpop.f32.mrf.mxu0
    %v174 = vadd.f32 %v136, %v173
    %v175 = vpop.f32.mrf.mxu0
    %v176 = vadd.f32 %v141, %v175
    %177 = vdwg.mxu0
    %v178 = vtanh.pop %v169
    %v179 = vtanh.pop %v171
    %v180 = vtanh.pop %v174
    %v181 = vtanh.pop %v176
    %v182 = vld [vmem:[%s5] sm:$0xff]
    %v183 = vld [vmem:[%s5 + $0x8] sm:$0xff]
    %v184 = vld [vmem:[%s5 + $0x10] sm:$0xff]
    %v185 = vld [vmem:[%s5 + $0x18] sm:$0xff]
    %187 = vset.pattern.permute.xlu0 0
    %188 = vperm.xlu0 %187, %v182
    %v189 = vpop.permute.xlu0 %188
    %192 = vset.pattern.permute.xlu0 0
    %193 = vperm.xlu0 %192, %v183
    %v194 = vpop.permute.xlu0 %193
    %197 = vset.pattern.permute.xlu0 0
    %198 = vperm.xlu0 %197, %v184
    %v199 = vpop.permute.xlu0 %198
    %202 = vset.pattern.permute.xlu0 0
    %203 = vperm.xlu0 %202, %v185
    %v204 = vpop.permute.xlu0 %203
    %v206 = vmul.f32 %v178, %v189
    %v207 = vmul.f32 %v179, %v194
    %v208 = vmul.f32 %v180, %v199
    %v209 = vmul.f32 %v181, %v204
    %vm210 = vcmask 64512
    %v211 = vsel %vm210, %v206, 0.0
    %v212 = vsel %vm210, %v207, 0.0
    %v213 = vadd.f32 %v211, %v212
    %v214 = vsel %vm210, %v208, 0.0
    %v215 = vadd.f32 %v213, %v214
    %v216 = vsel %vm210, %v209, 0.0
    %v217 = vadd.f32 %v215, %v216
    %v218 = vrot.slane %v217, 4
    %v219 = vadd.f32 %v217, %v218
    %v220 = vrot.slane %v219, 2
    %v221 = vadd.f32 %v219, %v220
    %v222 = vrot.slane %v221, 1
    %v223 = vadd.f32 %v221, %v222
    %s224 = sld [smem:[#allocation2]]
    %v225 = vstv %s224
    %v226 = vadd.f32 %v223, %v225
    %vm227 = vcmask 57344
    %228 = vst.msk [vmem:[#allocation3] sm:$0x1] %vm227, %v226
    // Predicated region
    $region30: #{tpu_custom_call.1} parent=1 // pred_check
      _
    $region31: #{tpu_custom_call.1} parent=1 // pred_check_branch
      %230 = sbr.rel (0) target = $region33
    $region32: #{tpu_custom_call.1} parent=1 // pred_region
      %232 = vsyncadd [#allocation4], 0
      %s234 = sshll.u32 [#allocation3], 4
      %s235 = int_to_ptr.vmem [resolvable:$true] %s234
      %s236 = sshll.u32 %s7, 4
      %s237 = int_to_ptr.hbm [resolvable:$true] %s236
      %239 = dma.vmem_to_hbm [thread:$0]  %s235, 16, %s237, [#allocation4]
    $region33: #{tpu_custom_call.1} parent=1 // pred_fallthru
      _
    // Predicated region
    $region34: #{tpu_custom_call.1} parent=1 // pred_check
      _
    $region35: #{tpu_custom_call.1} parent=1 // pred_check_branch
      %241 = sbr.rel (0) target = $region37
    $region36: #{tpu_custom_call.1} parent=1 // pred_region
      %243 = dma.done [#allocation4], 16
    $region37: #{tpu_custom_call.1} parent=1 // pred_fallthru
      _
    %244 = vsyncpa [#allocation4], 1

</llo_original>
